<compile_context>
chip_gen: v6e
topology: v6e:2x2x1
jax: 0.10.0
libtpu: 0.0.40
codegen_flags: <defaults>
</compile_context>

<pallas_src>
import functools

import jax
import jax.numpy as jnp
import numpy as np
from jax.experimental import pallas as pl
from jax.experimental.pallas import tpu as pltpu


def _round_up(x, m):
    return ((x + m - 1) // m) * m


def _unit_mlp_kernel(num_layers, x_ref, *refs):
    """refs = (w1, b1, w2, b2, ..., wL, bL, out_ref).

    x_ref   : (tm, C_in)      natural row-major tile (contiguous HBM DMA).
    w_ref l : (C_out_l, C_in_l)  native PyTorch Conv2d 1x1 layout, VMEM-resident.
    b_ref l : (C_out_l, 1) f32 column, broadcast over the lane (pixel) axis.
    out_ref : (tm, C_out)     natural row-major tile (contiguous HBM DMA).
    """
    out_ref = refs[-1]
    param_refs = refs[:-1]

    # Flip to (C_in, tm): big pixel axis on the 128-wide lane dim (XLU, cheap).
    h = jnp.transpose(x_ref[...])                        # (C_in, tm)
    for layer in range(num_layers):
        w = param_refs[2 * layer][...]                   # (C_out, C_in)
        b = param_refs[2 * layer + 1][...]               # (C_out, 1) f32
        rhs = h if h.dtype == w.dtype else h.astype(w.dtype)
        # MXU matmul with f32 accumulation; h stays f32 between layers even on
        # the bf16 compute path (only the matmul inputs are bf16).
        h = jnp.dot(w, rhs, preferred_element_type=jnp.float32)   # (C_out, tm)
        h = h + b                                        # lane-dense bias add
        if layer < num_layers - 1:
            h = jnp.maximum(h, 0.0)                      # ReLU (all but last)
    # Flip back to natural (tm, C_out) so the HBM writeback is a contiguous
    # row-major slab -- no wrapper-side XLA transpose of the output.
    out_ref[...] = jnp.transpose(h).astype(out_ref.dtype)


def unit_mlp_pallas(x, weights, biases, *, tm=8192, compute_dtype=None,
                    out_dtype=None):
    """x: (B, N, N, C_in) NHWC.

    weights[l]: (C_out_l, C_in_l)  -- PyTorch Conv2d weight with the 1x1 kernel
                                      dims squeezed out (native layout).
    biases[l]:  (C_out_l,)
    compute_dtype: dtype of x / weights fed to the MXU (e.g. jnp.bfloat16);
                   accumulation and inter-layer activations are always f32.
    out_dtype:     output dtype (defaults to x.dtype); bf16 here is the real
                   HBM saving if the consumer tolerates it.
    """
    B, N1, N2, C_in = x.shape
    num_layers = len(weights)
    c_outs = [w.shape[0] for w in weights]
    C_out = c_outs[-1]
    if compute_dtype is None:
        compute_dtype = x.dtype
    if out_dtype is None:
        out_dtype = x.dtype

    M = B * N1 * N2

    # tm: multiple of 128 (lane width), large by default, capped so there are
    # >= 8 grid steps when M allows (>= 3-4 per TensorCore on v7x).
    tm = max(128, min(_round_up(tm, 128), _round_up(pl.cdiv(M, 8), 128)))

    # Natural (M, C_in) view -- reshape of NHWC is free, no wrapper transpose.
    x2 = x.reshape(M, C_in)
    M_pad = _round_up(M, tm)
    if M_pad != M:
        x2 = jnp.pad(x2, ((0, M_pad - M), (0, 0)))   # pad rows give garbage rows
                                                     # that are sliced off below

    params = []
    in_specs = [pl.BlockSpec((tm, C_in), lambda i: (i, 0))]
    for w, b in zip(weights, biases):
        w_c = w.astype(compute_dtype)
        b_c = b.reshape(-1, 1).astype(jnp.float32)
        in_specs.append(pl.BlockSpec(w_c.shape, lambda i: (0, 0)))  # resident weight
        in_specs.append(pl.BlockSpec(b_c.shape, lambda i: (0, 0)))  # resident bias
        params.extend([w_c, b_c])

    # VMEM budget: double-buffered I/O tiles + resident params + a few f32
    # activation copies + slack; capped at 32 MiB (safe on v7x's 64 MiB/core).
    c_isize = jnp.dtype(compute_dtype).itemsize
    in_isize = jnp.dtype(x.dtype).itemsize
    out_isize = jnp.dtype(out_dtype).itemsize
    param_bytes = sum(int(np.prod(w.shape)) * c_isize + int(w.shape[0]) * 4
                      for w in weights)
    io_tile_bytes = tm * (C_in * in_isize + C_out * out_isize)
    act_bytes = tm * max([C_in] + c_outs) * 4
    need = 2 * io_tile_bytes + param_bytes + 4 * act_bytes + (2 << 20)
    vmem_limit_bytes = int(min(32 << 20, max(need, 8 << 20)))

    out = pl.pallas_call(
        functools.partial(_unit_mlp_kernel, num_layers),
        out_shape=jax.ShapeDtypeStruct((M_pad, C_out), out_dtype),
        grid_spec=pltpu.PrefetchScalarGridSpec(
            num_scalar_prefetch=0,
            grid=(M_pad // tm,),
            in_specs=in_specs,
            # Natural-layout output block: contiguous HBM writeback.
            out_specs=pl.BlockSpec((tm, C_out), lambda i: (i, 0)),
        ),
        compiler_params=pltpu.CompilerParams(
            dimension_semantics=("parallel",),
            vmem_limit_bytes=vmem_limit_bytes),
    )(x2, *params)

    # Slice pad rows (no-op when M % tm == 0) and reshape back to NHWC (free).
    return out[:M].reshape(B, N1, N2, C_out)


def unit_mlp_reference(x, weights, biases):
    """Plain-JAX reference (same math as the PyTorch module)."""
    h = x.astype(jnp.float32)
    for layer, (w, b) in enumerate(zip(weights, biases)):
        h = jnp.einsum("bijc,oc->bijo", h, w.astype(jnp.float32)) + b
        if layer < len(weights) - 1:
            h = jnp.maximum(h, 0.0)
    return h.astype(x.dtype)


if __name__ == "__main__":
    # Module hyper-params (synthetic, deterministic init — no checkpoint load).
    B, N, in_feat, out_feat, num_layers = 2, 16, 4, 32, 3

    key = jax.random.PRNGKey(0)
    key, kx = jax.random.split(key)
    x = jax.random.normal(kx, (B, N, N, in_feat), dtype=jnp.float32)

    weights, biases = [], []
    fan_in = in_feat
    for layer in range(num_layers):
        key, kw, kb = jax.random.split(key, 3)
        # PyTorch Conv2d weight is (out, in, 1, 1); we keep the native (out, in)
        # layout after squeezing the 1x1 kernel dims.
        bound = 1.0 / np.sqrt(fan_in)
        w = jax.random.uniform(kw, (out_feat, fan_in), dtype=jnp.float32,
                               minval=-bound, maxval=bound)
        b = jax.random.uniform(kb, (out_feat,), dtype=jnp.float32,
                               minval=-bound, maxval=bound)
        weights.append(w)
        biases.append(b)
        fan_in = out_feat

    y_ref = jax.block_until_ready(unit_mlp_reference(x, weights, biases))

    # f32 path: exact module semantics.
    y = jax.block_until_ready(unit_mlp_pallas(x, weights, biases))
    np.testing.assert_allclose(np.asarray(y), np.asarray(y_ref),
                               rtol=1e-5, atol=1e-5)

    # bf16 compute path (bf16 matmul inputs, f32 accumulation & activations).
    y_bf16 = jax.block_until_ready(
        unit_mlp_pallas(x, weights, biases, compute_dtype=jnp.bfloat16))
    np.testing.assert_allclose(np.asarray(y_bf16), np.asarray(y_ref),
                               rtol=1e-1, atol=1e-1)

    print("KERNEL_OK")
</pallas_src>

<mosaic_0001>
module attributes {stable_mosaic.version = 11 : i64} {
  func.func @_unit_mlp_kernel(%arg0: i32, %arg1: memref<128x4xf32, #tpu.memory_space<vmem>>, %arg2: memref<32x4xf32, #tpu.memory_space<vmem>>, %arg3: memref<32x1xf32, #tpu.memory_space<vmem>>, %arg4: memref<32x32xf32, #tpu.memory_space<vmem>>, %arg5: memref<32x1xf32, #tpu.memory_space<vmem>>, %arg6: memref<32x32xf32, #tpu.memory_space<vmem>>, %arg7: memref<32x1xf32, #tpu.memory_space<vmem>>, %arg8: memref<128x32xf32, #tpu.memory_space<vmem>>) attributes {dimension_semantics = [#tpu.dimension_semantics<parallel>], iteration_bounds = array<i64: 4>, scalar_prefetch = 0 : i64, scratch_operands = 0 : i64, tpu.core_type = #tpu.core_type<tc>, window_params = [{transform_indices = @transform_0, window_bounds = array<i64: 128, 4>}, {pipeline_mode = #tpu.pipeline_mode<synchronous>, transform_indices = @transform_1, window_bounds = array<i64: 32, 4>}, {pipeline_mode = #tpu.pipeline_mode<synchronous>, transform_indices = @transform_2, window_bounds = array<i64: 32, 1>}, {pipeline_mode = #tpu.pipeline_mode<synchronous>, transform_indices = @transform_3, window_bounds = array<i64: 32, 32>}, {pipeline_mode = #tpu.pipeline_mode<synchronous>, transform_indices = @transform_4, window_bounds = array<i64: 32, 1>}, {pipeline_mode = #tpu.pipeline_mode<synchronous>, transform_indices = @transform_5, window_bounds = array<i64: 32, 32>}, {pipeline_mode = #tpu.pipeline_mode<synchronous>, transform_indices = @transform_6, window_bounds = array<i64: 32, 1>}, {transform_indices = @transform_7, window_bounds = array<i64: 128, 32>}]} {
    %c0 = arith.constant 0 : index
    %c0_0 = arith.constant 0 : index
    %0 = vector.load %arg1[%c0, %c0_0] : memref<128x4xf32, #tpu.memory_space<vmem>>, vector<128x4xf32>
    %1 = tpu.transpose %0, [1, 0] : vector<128x4xf32> -> vector<4x128xf32>
    %c0_1 = arith.constant 0 : index
    %c0_2 = arith.constant 0 : index
    %2 = vector.load %arg2[%c0_1, %c0_2] : memref<32x4xf32, #tpu.memory_space<vmem>>, vector<32x4xf32>
    %c0_3 = arith.constant 0 : index
    %c0_4 = arith.constant 0 : index
    %3 = vector.load %arg3[%c0_3, %c0_4] : memref<32x1xf32, #tpu.memory_space<vmem>>, vector<32x1xf32>
    %cst = arith.constant dense<0.000000e+00> : vector<32x128xf32>
    %4 = tpu.matmul %2, %1, %cst {dimension_numbers = #tpu.dot_dimension_numbers<[1], [0], [0], [1], [0, 0, 1, 1], [], []>} : vector<32x4xf32>, vector<4x128xf32>, vector<32x128xf32> -> vector<32x128xf32>
    %5 = vector.broadcast %3 : vector<32x1xf32> to vector<32x128xf32>
    %6 = arith.addf %4, %5 : vector<32x128xf32>
    %cst_5 = arith.constant 0.000000e+00 : f32
    %7 = vector.broadcast %cst_5 : f32 to vector<32x128xf32>
    %8 = arith.maximumf %6, %7 : vector<32x128xf32>
    %c0_6 = arith.constant 0 : index
    %c0_7 = arith.constant 0 : index
    %9 = vector.load %arg4[%c0_6, %c0_7] : memref<32x32xf32, #tpu.memory_space<vmem>>, vector<32x32xf32>
    %c0_8 = arith.constant 0 : index
    %c0_9 = arith.constant 0 : index
    %10 = vector.load %arg5[%c0_8, %c0_9] : memref<32x1xf32, #tpu.memory_space<vmem>>, vector<32x1xf32>
    %cst_10 = arith.constant dense<0.000000e+00> : vector<32x128xf32>
    %11 = tpu.matmul %9, %8, %cst_10 {dimension_numbers = #tpu.dot_dimension_numbers<[1], [0], [0], [1], [0, 0, 1, 1], [], []>} : vector<32x32xf32>, vector<32x128xf32>, vector<32x128xf32> -> vector<32x128xf32>
    %12 = vector.broadcast %10 : vector<32x1xf32> to vector<32x128xf32>
    %13 = arith.addf %11, %12 : vector<32x128xf32>
    %cst_11 = arith.constant 0.000000e+00 : f32
    %14 = vector.broadcast %cst_11 : f32 to vector<32x128xf32>
    %15 = arith.maximumf %13, %14 : vector<32x128xf32>
    %c0_12 = arith.constant 0 : index
    %c0_13 = arith.constant 0 : index
    %16 = vector.load %arg6[%c0_12, %c0_13] : memref<32x32xf32, #tpu.memory_space<vmem>>, vector<32x32xf32>
    %c0_14 = arith.constant 0 : index
    %c0_15 = arith.constant 0 : index
    %17 = vector.load %arg7[%c0_14, %c0_15] : memref<32x1xf32, #tpu.memory_space<vmem>>, vector<32x1xf32>
    %cst_16 = arith.constant dense<0.000000e+00> : vector<32x128xf32>
    %18 = tpu.matmul %16, %15, %cst_16 {dimension_numbers = #tpu.dot_dimension_numbers<[1], [0], [0], [1], [0, 0, 1, 1], [], []>} : vector<32x32xf32>, vector<32x128xf32>, vector<32x128xf32> -> vector<32x128xf32>
    %19 = vector.broadcast %17 : vector<32x1xf32> to vector<32x128xf32>
    %20 = arith.addf %18, %19 : vector<32x128xf32>
    %21 = tpu.transpose %20, [1, 0] : vector<32x128xf32> -> vector<128x32xf32>
    %c0_17 = arith.constant 0 : index
    %c0_18 = arith.constant 0 : index
    %22 = vector.load %arg8[%c0_17, %c0_18] : memref<128x32xf32, #tpu.memory_space<vmem>>, vector<128x32xf32>
    tpu.vector_store %arg8[%c0_17, %c0_18], %21 {strides = array<i32>} : memref<128x32xf32, #tpu.memory_space<vmem>>, vector<128x32xf32>,
    return
  }
  func.func @transform_0(%arg0: i32) -> (i32, i32) {
    %c0_i32 = arith.constant 0 : i32
    %c0_i32_0 = arith.constant 0 : i32
    return %arg0, %c0_i32 : i32, i32
  }
  func.func @transform_1(%arg0: i32) -> (i32, i32) {
    %c0_i32 = arith.constant 0 : i32
    %c0_i32_0 = arith.constant 0 : i32
    %c0_i32_1 = arith.constant 0 : i32
    return %c0_i32, %c0_i32_0 : i32, i32
  }
  func.func @transform_2(%arg0: i32) -> (i32, i32) {
    %c0_i32 = arith.constant 0 : i32
    %c0_i32_0 = arith.constant 0 : i32
    %c0_i32_1 = arith.constant 0 : i32
    return %c0_i32, %c0_i32_0 : i32, i32
  }
  func.func @transform_3(%arg0: i32) -> (i32, i32) {
    %c0_i32 = arith.constant 0 : i32
    %c0_i32_0 = arith.constant 0 : i32
    %c0_i32_1 = arith.constant 0 : i32
    return %c0_i32, %c0_i32_0 : i32, i32
  }
  func.func @transform_4(%arg0: i32) -> (i32, i32) {
    %c0_i32 = arith.constant 0 : i32
    %c0_i32_0 = arith.constant 0 : i32
    %c0_i32_1 = arith.constant 0 : i32
    return %c0_i32, %c0_i32_0 : i32, i32
  }
  func.func @transform_5(%arg0: i32) -> (i32, i32) {
    %c0_i32 = arith.constant 0 : i32
    %c0_i32_0 = arith.constant 0 : i32
    %c0_i32_1 = arith.constant 0 : i32
    return %c0_i32, %c0_i32_0 : i32, i32
  }
  func.func @transform_6(%arg0: i32) -> (i32, i32) {
    %c0_i32 = arith.constant 0 : i32
    %c0_i32_0 = arith.constant 0 : i32
    %c0_i32_1 = arith.constant 0 : i32
    return %c0_i32, %c0_i32_0 : i32, i32
  }
  func.func @transform_7(%arg0: i32) -> (i32, i32) {
    %c0_i32 = arith.constant 0 : i32
    %c0_i32_0 = arith.constant 0 : i32
    return %arg0, %c0_i32 : i32, i32
  }
}

</mosaic_0001>

<llo_original>
// kernel: tpu_custom_call.1
$region0: #{tpu_custom_call.1}
  #allocation0 [shape = 'u32[]', space=smem, size = 0x4, offset = 0x4, fixed_abs, tag = 'smem constant byte address 0x4 - core index']
  #allocation1 [shape = 'u32[144,128]{1,0:T(1,128)}', space=vmem, size = 0x12000, scoped, tag = 'internal scratch']
  %s0 = inlined_call_operand.vmem [shape: f32[512,4], index: 0, kind: input, shape index: {}]
  %s1 = inlined_call_operand.vmem [shape: f32[32,4], index: 1, kind: input, shape index: {}]
  %s2 = inlined_call_operand.vmem [shape: f32[32,1], index: 2, kind: input, shape index: {}]
  %s3 = inlined_call_operand.vmem [shape: f32[32,32], index: 3, kind: input, shape index: {}]
  %s4 = inlined_call_operand.vmem [shape: f32[32,1], index: 4, kind: input, shape index: {}]
  %s5 = inlined_call_operand.vmem [shape: f32[32,32], index: 5, kind: input, shape index: {}]
  %s6 = inlined_call_operand.vmem [shape: f32[32,1], index: 6, kind: input, shape index: {}]
  %s7 = inlined_call_operand.vmem [shape: f32[512,32], index: 7, kind: output, shape index: {}]
  %s8 = sld [smem:[#allocation0]]
  $region61: #{tpu_custom_call.1} parent=0
    _
  %s10 = ssub.s32 1, %s8
  %s11 = scalar_select 0, %s10, %s8
  loop: start=0, step=1, limit=6
  $region2: #{tpu_custom_call.1} parent=0 // loop_pre_header
    _
  $region3: #{tpu_custom_call.1} parent=0 // loop_header
    %s13 = sphi 0, %s17
    %p14 = scmp.ge.s32.totalorder %s13, 6
    %s23 = sphi 0, %s25
    %s26 = sphi 0, %s23
    %s27 = sphi 0, %s26
    %s43 = sphi 0, %s27
    %s47 = sphi 0, %s47
    %s49 = sphi 0, %s47
    %s50 = sphi 0, %s49
    %s64 = sphi 0, %s50
    %s68 = sphi 0, %s68
    %s70 = sphi 0, %s68
    %s71 = sphi 0, %s70
    %s85 = sphi 0, %s71
    %s89 = sphi 0, %s89
    %s91 = sphi 0, %s89
    %s92 = sphi 0, %s91
    %s106 = sphi 0, %s92
    %s110 = sphi 0, %s110
    %s112 = sphi 0, %s110
    %s113 = sphi 0, %s112
    %s127 = sphi 0, %s113
    %s131 = sphi 0, %s131
    %s133 = sphi 0, %s131
    %s134 = sphi 0, %s133
    %s148 = sphi 0, %s134
    %s152 = sphi 0, %s152
    %s154 = sphi 0, %s152
    %s155 = sphi 0, %s154
    %s169 = sphi 0, %s155
    %s175 = sphi 0, %s177
    %s178 = sphi 0, %s175
    %s179 = sphi 0, %s178
    %s195 = sphi 0, %s179
  $region4: #{tpu_custom_call.1} parent=0 // loop_header_branch
    %16 = sbr.rel (%p14) target = $region8
  $region5: #{tpu_custom_call.1} parent=0 // loop_body
    %s18 = ssub.s32 %s13, 1
    %s19 = ssub.s32 %s13, 2
    %s20 = sadd.s32 %s13, 1
    %s21 = ssub.s32 %s13, %s20
    %p22 = scmp.eq.s32.totalorder %s21, 0
    %s24 = sadd.s32 %s23, 1
    %s25 = scalar_select %p22, %s23, %s24
    %p28 = pneg %p22
    %p29 = scmp.eq.s32.totalorder %s13, 3
    %p30 = por %p28, %p29
    %p31 = scmp.ne.s32.totalorder %s23, %s26
    %p32 = scmp.eq.s32.totalorder %s13, 0
    %p33 = por %p31, %p32
    %p34 = scmp.ne.s32.totalorder %s23, %s26
    %p35 = scmp.eq.s32.totalorder %s18, 3
    %p36 = por %p34, %p35
    %p37 = scmp.ne.s32.totalorder %s26, %s27
    %p38 = scmp.eq.s32.totalorder %s18, 0
    %p39 = por %p37, %p38
    %p40 = scmp.ne.s32.totalorder %s26, %s27
    %p41 = scmp.eq.s32.totalorder %s19, 3
    %p42 = por %p40, %p41
    %p44 = scmp.ne.s32.totalorder %s27, %s43
    %p45 = scmp.eq.s32.totalorder %s19, 0
    %p46 = por %p44, %p45
    %s48 = sadd.s32 %s47, 1
    %p51 = scmp.eq.s32.totalorder %s13, 3
    %p52 = scmp.ne.s32.totalorder %s47, %s49
    %p53 = scmp.eq.s32.totalorder %s13, 0
    %p54 = por %p52, %p53
    %p55 = scmp.ne.s32.totalorder %s47, %s49
    %p56 = scmp.eq.s32.totalorder %s18, 3
    %p57 = por %p55, %p56
    %p58 = scmp.ne.s32.totalorder %s49, %s50
    %p59 = scmp.eq.s32.totalorder %s18, 0
    %p60 = por %p58, %p59
    %p61 = scmp.ne.s32.totalorder %s49, %s50
    %p62 = scmp.eq.s32.totalorder %s19, 3
    %p63 = por %p61, %p62
    %p65 = scmp.ne.s32.totalorder %s50, %s64
    %p66 = scmp.eq.s32.totalorder %s19, 0
    %p67 = por %p65, %p66
    %s69 = sadd.s32 %s68, 1
    %p72 = scmp.eq.s32.totalorder %s13, 3
    %p73 = scmp.ne.s32.totalorder %s68, %s70
    %p74 = scmp.eq.s32.totalorder %s13, 0
    %p75 = por %p73, %p74
    %p76 = scmp.ne.s32.totalorder %s68, %s70
    %p77 = scmp.eq.s32.totalorder %s18, 3
    %p78 = por %p76, %p77
    %p79 = scmp.ne.s32.totalorder %s70, %s71
    %p80 = scmp.eq.s32.totalorder %s18, 0
    %p81 = por %p79, %p80
    %p82 = scmp.ne.s32.totalorder %s70, %s71
    %p83 = scmp.eq.s32.totalorder %s19, 3
    %p84 = por %p82, %p83
    %p86 = scmp.ne.s32.totalorder %s71, %s85
    %p87 = scmp.eq.s32.totalorder %s19, 0
    %p88 = por %p86, %p87
    %s90 = sadd.s32 %s89, 1
    %p93 = scmp.eq.s32.totalorder %s13, 3
    %p94 = scmp.ne.s32.totalorder %s89, %s91
    %p95 = scmp.eq.s32.totalorder %s13, 0
    %p96 = por %p94, %p95
    %p97 = scmp.ne.s32.totalorder %s89, %s91
    %p98 = scmp.eq.s32.totalorder %s18, 3
    %p99 = por %p97, %p98
    %p100 = scmp.ne.s32.totalorder %s91, %s92
    %p101 = scmp.eq.s32.totalorder %s18, 0
    %p102 = por %p100, %p101
    %p103 = scmp.ne.s32.totalorder %s91, %s92
    %p104 = scmp.eq.s32.totalorder %s19, 3
    %p105 = por %p103, %p104
    %p107 = scmp.ne.s32.totalorder %s92, %s106
    %p108 = scmp.eq.s32.totalorder %s19, 0
    %p109 = por %p107, %p108
    %s111 = sadd.s32 %s110, 1
    %p114 = scmp.eq.s32.totalorder %s13, 3
    %p115 = scmp.ne.s32.totalorder %s110, %s112
    %p116 = scmp.eq.s32.totalorder %s13, 0
    %p117 = por %p115, %p116
    %p118 = scmp.ne.s32.totalorder %s110, %s112
    %p119 = scmp.eq.s32.totalorder %s18, 3
    %p120 = por %p118, %p119
    %p121 = scmp.ne.s32.totalorder %s112, %s113
    %p122 = scmp.eq.s32.totalorder %s18, 0
    %p123 = por %p121, %p122
    %p124 = scmp.ne.s32.totalorder %s112, %s113
    %p125 = scmp.eq.s32.totalorder %s19, 3
    %p126 = por %p124, %p125
    %p128 = scmp.ne.s32.totalorder %s113, %s127
    %p129 = scmp.eq.s32.totalorder %s19, 0
    %p130 = por %p128, %p129
    %s132 = sadd.s32 %s131, 1
    %p135 = scmp.eq.s32.totalorder %s13, 3
    %p136 = scmp.ne.s32.totalorder %s131, %s133
    %p137 = scmp.eq.s32.totalorder %s13, 0
    %p138 = por %p136, %p137
    %p139 = scmp.ne.s32.totalorder %s131, %s133
    %p140 = scmp.eq.s32.totalorder %s18, 3
    %p141 = por %p139, %p140
    %p142 = scmp.ne.s32.totalorder %s133, %s134
    %p143 = scmp.eq.s32.totalorder %s18, 0
    %p144 = por %p142, %p143
    %p145 = scmp.ne.s32.totalorder %s133, %s134
    %p146 = scmp.eq.s32.totalorder %s19, 3
    %p147 = por %p145, %p146
    %p149 = scmp.ne.s32.totalorder %s134, %s148
    %p150 = scmp.eq.s32.totalorder %s19, 0
    %p151 = por %p149, %p150
    %s153 = sadd.s32 %s152, 1
    %p156 = scmp.eq.s32.totalorder %s13, 3
    %p157 = scmp.ne.s32.totalorder %s152, %s154
    %p158 = scmp.eq.s32.totalorder %s13, 0
    %p159 = por %p157, %p158
    %p160 = scmp.ne.s32.totalorder %s152, %s154
    %p161 = scmp.eq.s32.totalorder %s18, 3
    %p162 = por %p160, %p161
    %p163 = scmp.ne.s32.totalorder %s154, %s155
    %p164 = scmp.eq.s32.totalorder %s18, 0
    %p165 = por %p163, %p164
    %p166 = scmp.ne.s32.totalorder %s154, %s155
    %p167 = scmp.eq.s32.totalorder %s19, 3
    %p168 = por %p166, %p167
    %p170 = scmp.ne.s32.totalorder %s155, %s169
    %p171 = scmp.eq.s32.totalorder %s19, 0
    %p172 = por %p170, %p171
    %s173 = ssub.s32 %s13, %s20
    %p174 = scmp.eq.s32.totalorder %s173, 0
    %s176 = sadd.s32 %s175, 1
    %s177 = scalar_select %p174, %s175, %s176
    %p180 = pneg %p174
    %p181 = scmp.eq.s32.totalorder %s13, 3
    %p182 = por %p180, %p181
    %p183 = scmp.ne.s32.totalorder %s175, %s178
    %p184 = scmp.eq.s32.totalorder %s13, 0
    %p185 = por %p183, %p184
    %p186 = scmp.ne.s32.totalorder %s175, %s178
    %p187 = scmp.eq.s32.totalorder %s18, 3
    %p188 = por %p186, %p187
    %p189 = scmp.ne.s32.totalorder %s178, %s179
    %p190 = scmp.eq.s32.totalorder %s18, 0
    %p191 = por %p189, %p190
    %p192 = scmp.ne.s32.totalorder %s178, %s179
    %p193 = scmp.eq.s32.totalorder %s19, 3
    %p194 = por %p192, %p193
    %p196 = scmp.ne.s32.totalorder %s179, %s195
    %p197 = scmp.eq.s32.totalorder %s19, 0
    %p198 = por %p196, %p197
    %p199 = scmp.le.s32.totalorder 1, %s13
    %p200 = scmp.lt.s32.totalorder %s13, 5
    %p201 = pnand %p199, %p200
    %p202 = pneg %p201
    // Predicated region
    $region9: #{tpu_custom_call.1} parent=5 // pred_check
      _
    $region10: #{tpu_custom_call.1} parent=5 // pred_check_branch
      %204 = sbr.rel (%p201) target = $region12
    $region11: #{tpu_custom_call.1} parent=5 // pred_region
      %s205 = ssub.s32 %s13, 1
      // Predicated region
      $region13: #{tpu_custom_call.1} parent=11 // pred_check
        %p206 = pneg %p60
      $region14: #{tpu_custom_call.1} parent=11 // pred_check_branch
        %208 = sbr.rel (%p206) target = $region16
      $region15: #{tpu_custom_call.1} parent=11 // pred_region
        _
      $region16: #{tpu_custom_call.1} parent=11 // pred_fallthru
        _
      // Predicated region
      $region17: #{tpu_custom_call.1} parent=11 // pred_check
        %p209 = pneg %p81
      $region18: #{tpu_custom_call.1} parent=11 // pred_check_branch
        %211 = sbr.rel (%p209) target = $region20
      $region19: #{tpu_custom_call.1} parent=11 // pred_region
        _
      $region20: #{tpu_custom_call.1} parent=11 // pred_fallthru
        _
      // Predicated region
      $region21: #{tpu_custom_call.1} parent=11 // pred_check
        %p212 = pneg %p102
      $region22: #{tpu_custom_call.1} parent=11 // pred_check_branch
        %214 = sbr.rel (%p212) target = $region24
      $region23: #{tpu_custom_call.1} parent=11 // pred_region
        _
      $region24: #{tpu_custom_call.1} parent=11 // pred_fallthru
        _
      // Predicated region
      $region25: #{tpu_custom_call.1} parent=11 // pred_check
        %p215 = pneg %p123
      $region26: #{tpu_custom_call.1} parent=11 // pred_check_branch
        %217 = sbr.rel (%p215) target = $region28
      $region27: #{tpu_custom_call.1} parent=11 // pred_region
        _
      $region28: #{tpu_custom_call.1} parent=11 // pred_fallthru
        _
      // Predicated region
      $region29: #{tpu_custom_call.1} parent=11 // pred_check
        %p218 = pneg %p144
      $region30: #{tpu_custom_call.1} parent=11 // pred_check_branch
        %220 = sbr.rel (%p218) target = $region32
      $region31: #{tpu_custom_call.1} parent=11 // pred_region
        _
      $region32: #{tpu_custom_call.1} parent=11 // pred_fallthru
        _
      // Predicated region
      $region33: #{tpu_custom_call.1} parent=11 // pred_check
        %p221 = pneg %p165
      $region34: #{tpu_custom_call.1} parent=11 // pred_check_branch
        %223 = sbr.rel (%p221) target = $region36
      $region35: #{tpu_custom_call.1} parent=11 // pred_region
        _
      $region36: #{tpu_custom_call.1} parent=11 // pred_fallthru
        _
    $region12: #{tpu_custom_call.1} parent=5 // pred_fallthru
      _
    %p224 = scmp.lt.s32.totalorder %s13, 4
    // Predicated region
    $region37: #{tpu_custom_call.1} parent=5 // pred_check
      %p225 = pneg %p224
    $region38: #{tpu_custom_call.1} parent=5 // pred_check_branch
      %227 = sbr.rel (%p225) target = $region40
    $region39: #{tpu_custom_call.1} parent=5 // pred_region
      // Predicated region
      $region41: #{tpu_custom_call.1} parent=39 // pred_check
        %p228 = pneg %p33
      $region42: #{tpu_custom_call.1} parent=39 // pred_check_branch
        %230 = sbr.rel (%p228) target = $region44
      $region43: #{tpu_custom_call.1} parent=39 // pred_region
        %s231 = smul.u32 16, %s13
        %p232 = scmp.lt.s32.totalorder %s231, 63
        %s233 = scalar_select %p232, %s231, 63
        %s234 = smul.addr %s233, 8
        %s235 = scalar_lea.vmem %s0, %s234
        %s236 = smul.u32 16, %s13
      $region44: #{tpu_custom_call.1} parent=39 // pred_fallthru
        _
    $region40: #{tpu_custom_call.1} parent=5 // pred_fallthru
      _
    %p237 = scmp.le.s32.totalorder 1, %s13
    %p238 = scmp.lt.s32.totalorder %s13, 5
    %p239 = pnand %p237, %p238
    %p240 = pneg %p239
    // Predicated region
    $region45: #{tpu_custom_call.1} parent=5 // pred_check
      _
    $region46: #{tpu_custom_call.1} parent=5 // pred_check_branch
      %242 = sbr.rel (%p239) target = $region48
    $region47: #{tpu_custom_call.1} parent=5 // pred_region
      %s243 = ssub.s32 %s13, 1
      %s244 = smul.u32 16, %s18
      %p245 = scmp.lt.s32.totalorder %s244, 63
      %s246 = scalar_select %p245, %s244, 63
      %s247 = smul.addr %s246, 8
      %s248 = scalar_lea.vmem %s0, %s247
      %p249 = pneg %p39
      %p250 = pneg %p36
      %p251 = pneg %p60
      %p252 = pneg %p57
      %p253 = pneg %p81
      %p254 = pneg %p78
      %p255 = pneg %p102
      %p256 = pneg %p99
      %p257 = pneg %p123
      %p258 = pneg %p120
      %p259 = pneg %p144
      %p260 = pneg %p141
      %p261 = pneg %p165
      %p262 = pneg %p162
      %p263 = pneg %p191
      %p264 = pneg %p188
      %s265 = smul.u32 16, %s18
      %p266 = scmp.lt.s32.totalorder %s265, 63
      %s267 = scalar_select %p266, %s265, 63
      %s268 = smul.addr %s267, 8
      %s269 = scalar_lea.vmem %s7, %s268
      %s270 = smul.u32 16, %s18
      %p271 = scmp.lt.s32.totalorder %s270, 63
      %s272 = scalar_select %p271, %s270, 63
      %s273 = smul.addr %s272, 8
      %s274 = scalar_lea.vmem %s0, %s273
      %s275 = smul.u32 16, %s18
      %s276 = smul.u32 16, %s18
      %p277 = scmp.lt.s32.totalorder %s276, 63
      %s278 = scalar_select %p277, %s276, 63
      %s279 = smul.addr %s278, 8
      %s280 = scalar_lea.vmem %s7, %s279
      %s281 = smul.u32 16, %s18
      %v282 = vld [vmem:[%s274] sm:$0xff]
      %v283 = vld [vmem:[%s274 + $0x8] sm:$0xff]
      %v284 = vld [vmem:[%s274 + $0x10] sm:$0xff]
      %v285 = vld [vmem:[%s274 + $0x18] sm:$0xff]
      %v286 = vld [vmem:[%s274 + $0x20] sm:$0xff]
      %v287 = vld [vmem:[%s274 + $0x28] sm:$0xff]
      %v288 = vld [vmem:[%s274 + $0x30] sm:$0xff]
      %v289 = vld [vmem:[%s274 + $0x38] sm:$0xff]
      %v290 = vld [vmem:[%s274 + $0x40] sm:$0xff]
      %v291 = vld [vmem:[%s274 + $0x48] sm:$0xff]
      %v292 = vld [vmem:[%s274 + $0x50] sm:$0xff]
      %v293 = vld [vmem:[%s274 + $0x58] sm:$0xff]
      %v294 = vld [vmem:[%s274 + $0x60] sm:$0xff]
      %v295 = vld [vmem:[%s274 + $0x68] sm:$0xff]
      %v296 = vld [vmem:[%s274 + $0x70] sm:$0xff]
      %v297 = vld [vmem:[%s274 + $0x78] sm:$0xff]
      %v298 = vld [vmem:[%s1] sm:$0xff]
      %v299 = vld [vmem:[%s1 + $0x8] sm:$0xff]
      %v300 = vld [vmem:[%s1 + $0x10] sm:$0xff]
      %v301 = vld [vmem:[%s1 + $0x18] sm:$0xff]
      %v302 = vld [vmem:[%s2] sm:$0xff]
      %v303 = vld [vmem:[%s2 + $0x8] sm:$0xff]
      %v304 = vld [vmem:[%s2 + $0x10] sm:$0xff]
      %v305 = vld [vmem:[%s2 + $0x18] sm:$0xff]
      %307 = vset.pattern.permute.xlu0 0
      %308 = vperm.xlu0 %307, %v302
      %v309 = vpop.permute.xlu0 %308
      %312 = vset.pattern.permute.xlu0 0
      %313 = vperm.xlu0 %312, %v303
      %v314 = vpop.permute.xlu0 %313
      %317 = vset.pattern.permute.xlu0 0
      %318 = vperm.xlu0 %317, %v304
      %v319 = vpop.permute.xlu0 %318
      %322 = vset.pattern.permute.xlu0 0
      %323 = vperm.xlu0 %322, %v305
      %v324 = vpop.permute.xlu0 %323
      %vm326 = vcmask 31744
      %v328 = vsel %vm326, %v298, 0
      %v331 = vsel %vm326, %v299, 0
      %v334 = vsel %vm326, %v300, 0
      %v337 = vsel %vm326, %v301, 0
      %v340 = vsel %vm326, %v282, 0
      %v343 = vsel %vm326, %v283, 0
      %v346 = vsel %vm326, %v284, 0
      %v349 = vsel %vm326, %v285, 0
      %v352 = vsel %vm326, %v286, 0
      %v355 = vsel %vm326, %v287, 0
      %v358 = vsel %vm326, %v288, 0
      %v361 = vsel %vm326, %v289, 0
      %v364 = vsel %vm326, %v290, 0
      %v367 = vsel %vm326, %v291, 0
      %v370 = vsel %vm326, %v292, 0
      %v373 = vsel %vm326, %v293, 0
      %v376 = vsel %vm326, %v294, 0
      %v379 = vsel %vm326, %v295, 0
      %v382 = vsel %vm326, %v296, 0
      %v385 = vsel %vm326, %v297, 0
      %387 = vmatprep.subr.mxu0 0.0
      %388 = vmatpush1.xpose.msra.mxu0 %v385
      %389 = vmatprep.subr.mxu0 0.0
      %390 = vmatpush1.xpose.msra.mxu0 %v382
      %391 = vmatprep.subr.mxu0 0.0
      %392 = vmatpush1.xpose.msra.mxu0 %v379
      %393 = vmatprep.subr.mxu0 0.0
      %394 = vmatpush1.xpose.msra.mxu0 %v376
      %395 = vmatprep.subr.mxu0 0.0
      %396 = vmatpush1.xpose.msra.mxu0 %v373
      %397 = vmatprep.subr.mxu0 0.0
      %398 = vmatpush1.xpose.msra.mxu0 %v370
      %399 = vmatprep.subr.mxu0 0.0
      %400 = vmatpush1.xpose.msra.mxu0 %v367
      %401 = vmatprep.subr.mxu0 0.0
      %402 = vmatpush1.xpose.msra.mxu0 %v364
      %403 = vmatprep.subr.mxu0 0.0
      %404 = vmatpush1.xpose.msra.mxu0 %v361
      %405 = vmatprep.subr.mxu0 0.0
      %406 = vmatpush1.xpose.msra.mxu0 %v358
      %407 = vmatprep.subr.mxu0 0.0
      %408 = vmatpush1.xpose.msra.mxu0 %v355
      %409 = vmatprep.subr.mxu0 0.0
      %410 = vmatpush1.xpose.msra.mxu0 %v352
      %411 = vmatprep.subr.mxu0 0.0
      %412 = vmatpush1.xpose.msra.mxu0 %v349
      %413 = vmatprep.subr.mxu0 0.0
      %414 = vmatpush1.xpose.msra.mxu0 %v346
      %415 = vmatprep.subr.mxu0 0.0
      %416 = vmatpush1.xpose.msra.mxu0 %v343
      %417 = vmatprep.subr.mxu0 0.0
      %418 = vmatpush1.xpose.msra.mxu0 %v340
      %419 = vmatprep.subr.mxu0 0.0
      %420 = vmatpush2.xpose.msra.mxu0 0.0
      %421 = vmatprep.subr.mxu0 0.0
      %422 = vmatpush2.xpose.msra.mxu0 0.0
      %423 = vmatprep.subr.mxu0 0.0
      %424 = vmatpush2.xpose.msra.mxu0 0.0
      %425 = vmatprep.subr.mxu0 0.0
      %426 = vmatpush2.xpose.msra.mxu0 0.0
      %427 = vmatprep.subr.mxu0 0.0
      %428 = vmatpush2.xpose.msra.mxu0 0.0
      %429 = vmatprep.subr.mxu0 0.0
      %430 = vmatpush2.xpose.msra.mxu0 0.0
      %431 = vmatprep.subr.mxu0 0.0
      %432 = vmatpush2.xpose.msra.mxu0 0.0
      %433 = vmatprep.subr.mxu0 0.0
      %434 = vmatpush2.xpose.msra.mxu0 0.0
      %435 = vmatprep.subr.mxu0 0.0
      %436 = vmatpush2.xpose.msra.mxu0 0.0
      %437 = vmatprep.subr.mxu0 0.0
      %438 = vmatpush2.xpose.msra.mxu0 0.0
      %439 = vmatprep.subr.mxu0 0.0
      %440 = vmatpush2.xpose.msra.mxu0 0.0
      %441 = vmatprep.subr.mxu0 0.0
      %442 = vmatpush2.xpose.msra.mxu0 0.0
      %443 = vmatprep.subr.mxu0 0.0
      %444 = vmatpush2.xpose.msra.mxu0 0.0
      %445 = vmatprep.subr.mxu0 0.0
      %446 = vmatpush2.xpose.msra.mxu0 0.0
      %447 = vmatprep.subr.mxu0 0.0
      %448 = vmatpush2.xpose.msra.mxu0 0.0
      %449 = vmatprep.subr.mxu0 0.0
      %450 = vmatpush2.xpose.msra.mxu0 0.0
      %451 = vmatprep.mubr.f32.mxu0 0.0
      %452 = vmatmul.mubr.f32.gmra.mxu0 %v328
      %v453 = vpop.f32.mrf.mxu0
      %v454 = vadd.f32 %v309, %v453
      %v455 = vpop.f32.mrf.mxu0
      %456 = vmatprep.mubr.f32.mxu0 0.0
      %457 = vmatmul.mubr.f32.gmra.mxu0 %v331
      %v458 = vpop.f32.mrf.mxu0
      %v459 = vadd.f32 %v314, %v458
      %v460 = vpop.f32.mrf.mxu0
      %461 = vmatprep.mubr.f32.mxu0 0.0
      %462 = vmatmul.mubr.f32.gmra.mxu0 %v334
      %v463 = vpop.f32.mrf.mxu0
      %v464 = vadd.f32 %v319, %v463
      %v465 = vpop.f32.mrf.mxu0
      %466 = vmatprep.mubr.f32.mxu0 0.0
      %467 = vmatmul.mubr.f32.gmra.mxu0 %v337
      %v468 = vpop.f32.mrf.mxu0
      %v469 = vadd.f32 %v324, %v468
      %v470 = vpop.f32.mrf.mxu0
      %471 = vdwg.mxu0
      %v472 = vmax.f32 %v454, 0.0
      %v473 = vmax.f32 %v459, 0.0
      %v474 = vmax.f32 %v464, 0.0
      %v475 = vmax.f32 %v469, 0.0
      %v476 = vld [vmem:[%s3] sm:$0xff]
      %v477 = vld [vmem:[%s3 + $0x8] sm:$0xff]
      %v478 = vld [vmem:[%s3 + $0x10] sm:$0xff]
      %v479 = vld [vmem:[%s3 + $0x18] sm:$0xff]
      %v480 = vld [vmem:[%s4] sm:$0xff]
      %v481 = vld [vmem:[%s4 + $0x8] sm:$0xff]
      %v482 = vld [vmem:[%s4 + $0x10] sm:$0xff]
      %v483 = vld [vmem:[%s4 + $0x18] sm:$0xff]
      %485 = vset.pattern.permute.xlu0 0
      %486 = vperm.xlu0 %485, %v480
      %v487 = vpop.permute.xlu0 %486
      %490 = vset.pattern.permute.xlu0 0
      %491 = vperm.xlu0 %490, %v481
      %v492 = vpop.permute.xlu0 %491
      %495 = vset.pattern.permute.xlu0 0
      %496 = vperm.xlu0 %495, %v482
      %v497 = vpop.permute.xlu0 %496
      %500 = vset.pattern.permute.xlu0 0
      %501 = vperm.xlu0 %500, %v483
      %v502 = vpop.permute.xlu0 %501
      %vm504 = vcmask 261120
      %v506 = vsel %vm504, %v476, 0
      %v509 = vsel %vm504, %v477, 0
      %v512 = vsel %vm504, %v478, 0
      %v515 = vsel %vm504, %v479, 0
      %517 = vmatprep.subr.mxu0 0.0
      %518 = vmatpush1.msra.mxu0 0.0
      %519 = vmatprep.subr.mxu0 0.0
      %520 = vmatpush1.msra.mxu0 0.0
      %521 = vmatprep.subr.mxu0 0.0
      %522 = vmatpush1.msra.mxu0 0.0
      %523 = vmatprep.subr.mxu0 0.0
      %524 = vmatpush1.msra.mxu0 0.0
      %525 = vmatprep.subr.mxu0 0.0
      %526 = vmatpush1.msra.mxu0 0.0
      %527 = vmatprep.subr.mxu0 0.0
      %528 = vmatpush1.msra.mxu0 0.0
      %529 = vmatprep.subr.mxu0 0.0
      %530 = vmatpush1.msra.mxu0 0.0
      %531 = vmatprep.subr.mxu0 0.0
      %532 = vmatpush1.msra.mxu0 0.0
      %533 = vmatprep.subr.mxu0 0.0
      %534 = vmatpush1.msra.mxu0 0.0
      %535 = vmatprep.subr.mxu0 0.0
      %536 = vmatpush1.msra.mxu0 0.0
      %537 = vmatprep.subr.mxu0 0.0
      %538 = vmatpush1.msra.mxu0 0.0
      %539 = vmatprep.subr.mxu0 0.0
      %540 = vmatpush1.msra.mxu0 0.0
      %541 = vmatprep.subr.mxu0 0.0
      %542 = vmatpush1.msra.mxu0 %v475
      %543 = vmatprep.subr.mxu0 0.0
      %544 = vmatpush1.msra.mxu0 %v474
      %545 = vmatprep.subr.mxu0 0.0
      %546 = vmatpush1.msra.mxu0 %v473
      %547 = vmatprep.subr.mxu0 0.0
      %548 = vmatpush1.msra.mxu0 %v472
      %549 = vmatprep.subr.mxu0 0.0
      %550 = vmatpush2.msra.mxu0 0.0
      %551 = vmatprep.subr.mxu0 0.0
      %552 = vmatpush2.msra.mxu0 0.0
      %553 = vmatprep.subr.mxu0 0.0
      %554 = vmatpush2.msra.mxu0 0.0
      %555 = vmatprep.subr.mxu0 0.0
      %556 = vmatpush2.msra.mxu0 0.0
      %557 = vmatprep.subr.mxu0 0.0
      %558 = vmatpush2.msra.mxu0 0.0
      %559 = vmatprep.subr.mxu0 0.0
      %560 = vmatpush2.msra.mxu0 0.0
      %561 = vmatprep.subr.mxu0 0.0
      %562 = vmatpush2.msra.mxu0 0.0
      %563 = vmatprep.subr.mxu0 0.0
      %564 = vmatpush2.msra.mxu0 0.0
      %565 = vmatprep.subr.mxu0 0.0
      %566 = vmatpush2.msra.mxu0 0.0
      %567 = vmatprep.subr.mxu0 0.0
      %568 = vmatpush2.msra.mxu0 0.0
      %569 = vmatprep.subr.mxu0 0.0
      %570 = vmatpush2.msra.mxu0 0.0
      %571 = vmatprep.subr.mxu0 0.0
      %572 = vmatpush2.msra.mxu0 0.0
      %573 = vmatprep.subr.mxu0 0.0
      %574 = vmatpush2.msra.mxu0 0.0
      %575 = vmatprep.subr.mxu0 0.0
      %576 = vmatpush2.msra.mxu0 0.0
      %577 = vmatprep.subr.mxu0 0.0
      %578 = vmatpush2.msra.mxu0 0.0
      %579 = vmatprep.subr.mxu0 0.0
      %580 = vmatpush2.msra.mxu0 0.0
      %581 = vmatprep.mubr.f32.mxu0 0.0
      %582 = vmatmul.mubr.f32.gmra.mxu0 %v506
      %v583 = vpop.f32.mrf.mxu0
      %v584 = vadd.f32 %v487, %v583
      %v585 = vpop.f32.mrf.mxu0
      %586 = vmatprep.mubr.f32.mxu0 0.0
      %587 = vmatmul.mubr.f32.gmra.mxu0 %v509
      %v588 = vpop.f32.mrf.mxu0
      %v589 = vadd.f32 %v492, %v588
      %v590 = vpop.f32.mrf.mxu0
      %591 = vmatprep.mubr.f32.mxu0 0.0
      %592 = vmatmul.mubr.f32.gmra.mxu0 %v512
      %v593 = vpop.f32.mrf.mxu0
      %v594 = vadd.f32 %v497, %v593
      %v595 = vpop.f32.mrf.mxu0
      %596 = vmatprep.mubr.f32.mxu0 0.0
      %597 = vmatmul.mubr.f32.gmra.mxu0 %v515
      %v598 = vpop.f32.mrf.mxu0
      %v599 = vadd.f32 %v502, %v598
      %v600 = vpop.f32.mrf.mxu0
      %601 = vdwg.mxu0
      %v602 = vmax.f32 %v584, 0.0
      %v603 = vmax.f32 %v589, 0.0
      %v604 = vmax.f32 %v594, 0.0
      %v605 = vmax.f32 %v599, 0.0
      %v606 = vld [vmem:[%s5] sm:$0xff]
      %v607 = vld [vmem:[%s5 + $0x8] sm:$0xff]
      %v608 = vld [vmem:[%s5 + $0x10] sm:$0xff]
      %v609 = vld [vmem:[%s5 + $0x18] sm:$0xff]
      %v610 = vld [vmem:[%s6] sm:$0xff]
      %v611 = vld [vmem:[%s6 + $0x8] sm:$0xff]
      %v612 = vld [vmem:[%s6 + $0x10] sm:$0xff]
      %v613 = vld [vmem:[%s6 + $0x18] sm:$0xff]
      %615 = vset.pattern.permute.xlu0 0
      %616 = vperm.xlu0 %615, %v610
      %v617 = vpop.permute.xlu0 %616
      %620 = vset.pattern.permute.xlu0 0
      %621 = vperm.xlu0 %620, %v611
      %v622 = vpop.permute.xlu0 %621
      %625 = vset.pattern.permute.xlu0 0
      %626 = vperm.xlu0 %625, %v612
      %v627 = vpop.permute.xlu0 %626
      %630 = vset.pattern.permute.xlu0 0
      %631 = vperm.xlu0 %630, %v613
      %v632 = vpop.permute.xlu0 %631
      %v635 = vsel %vm504, %v606, 0
      %v638 = vsel %vm504, %v607, 0
      %v641 = vsel %vm504, %v608, 0
      %v644 = vsel %vm504, %v609, 0
      %646 = vmatprep.subr.mxu0 0.0
      %647 = vmatpush1.msra.mxu0 0.0
      %648 = vmatprep.subr.mxu0 0.0
      %649 = vmatpush1.msra.mxu0 0.0
      %650 = vmatprep.subr.mxu0 0.0
      %651 = vmatpush1.msra.mxu0 0.0
      %652 = vmatprep.subr.mxu0 0.0
      %653 = vmatpush1.msra.mxu0 0.0
      %654 = vmatprep.subr.mxu0 0.0
      %655 = vmatpush1.msra.mxu0 0.0
      %656 = vmatprep.subr.mxu0 0.0
      %657 = vmatpush1.msra.mxu0 0.0
      %658 = vmatprep.subr.mxu0 0.0
      %659 = vmatpush1.msra.mxu0 0.0
      %660 = vmatprep.subr.mxu0 0.0
      %661 = vmatpush1.msra.mxu0 0.0
      %662 = vmatprep.subr.mxu0 0.0
      %663 = vmatpush1.msra.mxu0 0.0
      %664 = vmatprep.subr.mxu0 0.0
      %665 = vmatpush1.msra.mxu0 0.0
      %666 = vmatprep.subr.mxu0 0.0
      %667 = vmatpush1.msra.mxu0 0.0
      %668 = vmatprep.subr.mxu0 0.0
      %669 = vmatpush1.msra.mxu0 0.0
      %670 = vmatprep.subr.mxu0 0.0
      %671 = vmatpush1.msra.mxu0 %v605
      %672 = vmatprep.subr.mxu0 0.0
      %673 = vmatpush1.msra.mxu0 %v604
      %674 = vmatprep.subr.mxu0 0.0
      %675 = vmatpush1.msra.mxu0 %v603
      %676 = vmatprep.subr.mxu0 0.0
      %677 = vmatpush1.msra.mxu0 %v602
      %678 = vmatprep.subr.mxu0 0.0
      %679 = vmatpush2.msra.mxu0 0.0
      %680 = vmatprep.subr.mxu0 0.0
      %681 = vmatpush2.msra.mxu0 0.0
      %682 = vmatprep.subr.mxu0 0.0
      %683 = vmatpush2.msra.mxu0 0.0
      %684 = vmatprep.subr.mxu0 0.0
      %685 = vmatpush2.msra.mxu0 0.0
      %686 = vmatprep.subr.mxu0 0.0
      %687 = vmatpush2.msra.mxu0 0.0
      %688 = vmatprep.subr.mxu0 0.0
      %689 = vmatpush2.msra.mxu0 0.0
      %690 = vmatprep.subr.mxu0 0.0
      %691 = vmatpush2.msra.mxu0 0.0
      %692 = vmatprep.subr.mxu0 0.0
      %693 = vmatpush2.msra.mxu0 0.0
      %694 = vmatprep.subr.mxu0 0.0
      %695 = vmatpush2.msra.mxu0 0.0
      %696 = vmatprep.subr.mxu0 0.0
      %697 = vmatpush2.msra.mxu0 0.0
      %698 = vmatprep.subr.mxu0 0.0
      %699 = vmatpush2.msra.mxu0 0.0
      %700 = vmatprep.subr.mxu0 0.0
      %701 = vmatpush2.msra.mxu0 0.0
      %702 = vmatprep.subr.mxu0 0.0
      %703 = vmatpush2.msra.mxu0 0.0
      %704 = vmatprep.subr.mxu0 0.0
      %705 = vmatpush2.msra.mxu0 0.0
      %706 = vmatprep.subr.mxu0 0.0
      %707 = vmatpush2.msra.mxu0 0.0
      %708 = vmatprep.subr.mxu0 0.0
      %709 = vmatpush2.msra.mxu0 0.0
      %710 = vmatprep.mubr.f32.mxu0 0.0
      %711 = vmatmul.mubr.f32.gmra.mxu0 %v635
      %v712 = vpop.f32.mrf.mxu0
      %v713 = vadd.f32 %v617, %v712
      %v714 = vpop.f32.mrf.mxu0
      %715 = vmatprep.mubr.f32.mxu0 0.0
      %716 = vmatmul.mubr.f32.gmra.mxu0 %v638
      %v717 = vpop.f32.mrf.mxu0
      %v718 = vadd.f32 %v622, %v717
      %v719 = vpop.f32.mrf.mxu0
      %720 = vmatprep.mubr.f32.mxu0 0.0
      %721 = vmatmul.mubr.f32.gmra.mxu0 %v641
      %v722 = vpop.f32.mrf.mxu0
      %v723 = vadd.f32 %v627, %v722
      %v724 = vpop.f32.mrf.mxu0
      %725 = vmatprep.mubr.f32.mxu0 0.0
      %726 = vmatmul.mubr.f32.gmra.mxu0 %v644
      %v727 = vpop.f32.mrf.mxu0
      %v728 = vadd.f32 %v632, %v727
      %v729 = vpop.f32.mrf.mxu0
      %730 = vdwg.mxu0
      %731 = vxpose.xlu0.b32.start [1/16] %v713, 128
      %732 = vxpose.xlu0.b32.cont [2/16] %v718, 128
      %733 = vxpose.xlu0.b32.cont [3/16] %v723, 128
      %734 = vxpose.xlu0.b32.cont [4/16] %v728, 128
      %735 = vxpose.xlu0.b32.cont [5/16] 0.0, 128
      %736 = vxpose.xlu0.b32.cont [6/16] 0.0, 128
      %737 = vxpose.xlu0.b32.cont [7/16] 0.0, 128
      %738 = vxpose.xlu0.b32.cont [8/16] 0.0, 128
      %739 = vxpose.xlu0.b32.cont [9/16] 0.0, 128
      %740 = vxpose.xlu0.b32.cont [10/16] 0.0, 128
      %741 = vxpose.xlu0.b32.cont [11/16] 0.0, 128
      %742 = vxpose.xlu0.b32.cont [12/16] 0.0, 128
      %743 = vxpose.xlu0.b32.cont [13/16] 0.0, 128
      %744 = vxpose.xlu0.b32.cont [14/16] 0.0, 128
      %745 = vxpose.xlu0.b32.cont [15/16] 0.0, 128
      %746 = vxpose.xlu0.b32.end [16/16] 0.0, 128
      %v747 = vpop.trf.xlu0
      %v748 = vpop.trf.xlu0
      %v749 = vpop.trf.xlu0
      %v750 = vpop.trf.xlu0
      %v751 = vpop.trf.xlu0
      %v752 = vpop.trf.xlu0
      %v753 = vpop.trf.xlu0
      %v754 = vpop.trf.xlu0
      %v755 = vpop.trf.xlu0
      %v756 = vpop.trf.xlu0
      %v757 = vpop.trf.xlu0
      %v758 = vpop.trf.xlu0
      %v759 = vpop.trf.xlu0
      %v760 = vpop.trf.xlu0
      %v761 = vpop.trf.xlu0
      %v762 = vpop.trf.xlu0
      %763 = vst.msk [vmem:[%s280] sm:$0xff] %vm504, %v747
      %764 = vst.msk [vmem:[%s280 + $0x8] sm:$0xff] %vm504, %v748
      %765 = vst.msk [vmem:[%s280 + $0x10] sm:$0xff] %vm504, %v749
      %766 = vst.msk [vmem:[%s280 + $0x18] sm:$0xff] %vm504, %v750
      %767 = vst.msk [vmem:[%s280 + $0x20] sm:$0xff] %vm504, %v751
      %768 = vst.msk [vmem:[%s280 + $0x28] sm:$0xff] %vm504, %v752
      %769 = vst.msk [vmem:[%s280 + $0x30] sm:$0xff] %vm504, %v753
      %770 = vst.msk [vmem:[%s280 + $0x38] sm:$0xff] %vm504, %v754
      %771 = vst.msk [vmem:[%s280 + $0x40] sm:$0xff] %vm504, %v755
      %772 = vst.msk [vmem:[%s280 + $0x48] sm:$0xff] %vm504, %v756
      %773 = vst.msk [vmem:[%s280 + $0x50] sm:$0xff] %vm504, %v757
      %774 = vst.msk [vmem:[%s280 + $0x58] sm:$0xff] %vm504, %v758
      %775 = vst.msk [vmem:[%s280 + $0x60] sm:$0xff] %vm504, %v759
      %776 = vst.msk [vmem:[%s280 + $0x68] sm:$0xff] %vm504, %v760
      %777 = vst.msk [vmem:[%s280 + $0x70] sm:$0xff] %vm504, %v761
      %778 = vst.msk [vmem:[%s280 + $0x78] sm:$0xff] %vm504, %v762
      %s779 = smul.u32 16, %s18
      %p780 = scmp.lt.s32.totalorder %s779, 63
      %s781 = scalar_select %p780, %s779, 63
      %s782 = smul.addr %s781, 8
      %s783 = scalar_lea.vmem %s7, %s782
      // Predicated region
      $region49: #{tpu_custom_call.1} parent=47 // pred_check
        %p784 = pneg %p188
      $region50: #{tpu_custom_call.1} parent=47 // pred_check_branch
        %786 = sbr.rel (%p784) target = $region52
      $region51: #{tpu_custom_call.1} parent=47 // pred_region
        %s787 = smul.u32 16, %s18
      $region52: #{tpu_custom_call.1} parent=47 // pred_fallthru
        _
    $region48: #{tpu_custom_call.1} parent=5 // pred_fallthru
      _
    %p788 = scmp.le.s32.totalorder 2, %s13
    // Predicated region
    $region53: #{tpu_custom_call.1} parent=5 // pred_check
      %p789 = pneg %p788
    $region54: #{tpu_custom_call.1} parent=5 // pred_check_branch
      %791 = sbr.rel (%p789) target = $region56
    $region55: #{tpu_custom_call.1} parent=5 // pred_region
      %s792 = ssub.s32 %s13, 2
      // Predicated region
      $region57: #{tpu_custom_call.1} parent=55 // pred_check
        %p793 = pneg %p194
      $region58: #{tpu_custom_call.1} parent=55 // pred_check_branch
        %795 = sbr.rel (%p793) target = $region60
      $region59: #{tpu_custom_call.1} parent=55 // pred_region
        %s796 = smul.u32 16, %s19
        %p797 = scmp.lt.s32.totalorder %s796, 63
        %s798 = scalar_select %p797, %s796, 63
        %s799 = smul.addr %s798, 8
        %s800 = scalar_lea.vmem %s7, %s799
      $region60: #{tpu_custom_call.1} parent=55 // pred_fallthru
        _
    $region56: #{tpu_custom_call.1} parent=5 // pred_fallthru
      _
  $region6: #{tpu_custom_call.1} parent=0 // loop_footer
    %s17 = sadd.s32 1, %s13
  $region7: #{tpu_custom_call.1} parent=0 // loop_footer_branch
    %12 = sbr.rel target = $region3
  $region8: #{tpu_custom_call.1} parent=0 // loop_exit
    _

</llo_original>
